<compile_context>
chip_gen: v6e
topology: v6e:2x2x1
jax: 0.10.0
libtpu: 0.0.40
codegen_flags: <defaults>
</compile_context>

<pallas_src>
import functools

import jax
import jax.numpy as jnp
from jax.experimental import pallas as pl
from jax.experimental.pallas import tpu as pltpu


def attention_kernel(hidp_ref, enc_ref, wet_ref, v_ref, out_ref, scores_ref,
                     *, TB, T_TILE, num_t, H):
    # hidp_ref:   (TB, H)         f32   -- hidden @ Wh^T + b (precomputed in wrapper)
    # enc_ref:    (TB, T_TILE, H) bf16/f32 encoder tile
    # wet_ref:    (H, H)          bf16/f32 We^T (pre-transposed, resident)
    # v_ref:      (1, H)          f32
    # out_ref:    (TB, T)         f32
    # scores_ref: (TB, T)         f32 VMEM scratch (only used when num_t > 1)
    ti = pl.program_id(1)

    # One big MXU matmul: (TB*T_TILE, H) x (H, H) -> f32 accumulate.
    enc2d = enc_ref[...].reshape(TB * T_TILE, H)
    pre = jnp.dot(enc2d, wet_ref[...], preferred_element_type=jnp.float32)
    pre = pre.reshape(TB, T_TILE, H)

    # tanh(enc@We^T + (hid@Wh^T + b)) in f32.
    energy = jnp.tanh(pre + hidp_ref[...].reshape(TB, 1, H))          # (TB, T_TILE, H)

    # v contraction as VPU multiply + lane reduction (keeps the MXU free).
    scores = jnp.sum(energy * v_ref[...].reshape(1, 1, H), axis=-1)   # (TB, T_TILE)

    def _softmax(s):
        m = jnp.max(s, axis=-1, keepdims=True)
        p = jnp.exp(s - m)
        return p / jnp.sum(p, axis=-1, keepdims=True)

    if num_t == 1:
        # Single T tile: softmax directly, no scratch round-trip.
        out_ref[...] = _softmax(scores).astype(out_ref.dtype)
    else:
        # Accumulate per-tile scores; softmax once on the last T step.
        t0 = pl.multiple_of(ti * T_TILE, T_TILE)
        scores_ref[:, pl.ds(t0, T_TILE)] = scores

        @pl.when(ti == num_t - 1)
        def _():
            out_ref[...] = _softmax(scores_ref[...]).astype(out_ref.dtype)


def attention_pallas(hidden, encoder_outputs, W, b, v, *,
                     tb=8, compute_dtype=jnp.bfloat16):
    """hidden (B,H), encoder_outputs (B,T,H), W (H,2H), b (H,), v (H,) -> (B,T) f32."""
    B, T, H = encoder_outputs.shape
    hidden = hidden.astype(jnp.float32)
    W = W.astype(jnp.float32)

    Wh = W[:, :H]                       # applied to the repeated `hidden`
    We_T = W[:, H:].T                   # pre-transposed: enc @ We_T == enc @ We^T

    # Hoisted hidden projection (includes bias): one full-batch XLA matmul.
    hid_proj = jnp.dot(hidden, Wh.T, precision=jax.lax.Precision.HIGHEST) \
        + b.astype(jnp.float32)                                       # (B, H) f32

    # ---- Batch tiling: TB rows per grid step ((8,128)-legal by construction).
    if B < 8:
        TB = B                          # block equals full (padded) batch dim
    else:
        TB = max(8, (tb // 8) * 8)      # multiple of 8
    B_pad = -(-B // TB) * TB
    if B_pad != B:
        hid_proj = jnp.pad(hid_proj, ((0, B_pad - B), (0, 0)))
        encoder_outputs = jnp.pad(encoder_outputs,
                                  ((0, B_pad - B), (0, 0), (0, 0)))

    # ---- T tiling: keep the double-buffered encoder block within ~16 MiB/buffer.
    itemsize = jnp.dtype(compute_dtype).itemsize
    enc_budget = 16 * 1024 * 1024
    t_fit = max(1, enc_budget // (2 * TB * H * itemsize))
    if T <= t_fit:
        T_TILE = T
    else:
        T_TILE = T                      # fallback: whole T axis in one block
        c = (t_fit // 128) * 128
        while c >= 128:                 # largest 128-aligned divisor of T that fits
            if T % c == 0:
                T_TILE = c
                break
            c -= 128
    num_t = T // T_TILE

    enc = encoder_outputs.astype(compute_dtype)
    we_t = We_T.astype(compute_dtype)
    v2 = v.reshape(1, H).astype(jnp.float32)

    kernel = functools.partial(attention_kernel, TB=TB, T_TILE=T_TILE,
                               num_t=num_t, H=H)

    out = pl.pallas_call(
        kernel,
        out_shape=jax.ShapeDtypeStruct((B_pad, T), jnp.float32),
        grid_spec=pltpu.PrefetchScalarGridSpec(
            num_scalar_prefetch=0,
            grid=(B_pad // TB, num_t),
            in_specs=[
                pl.BlockSpec((TB, H), lambda bi, ti: (bi, 0)),              # hid_proj
                pl.BlockSpec((TB, T_TILE, H), lambda bi, ti: (bi, ti, 0)),  # encoder tile
                pl.BlockSpec((H, H), lambda bi, ti: (0, 0)),                # We^T (resident)
                pl.BlockSpec((1, H), lambda bi, ti: (0, 0)),                # v (resident)
            ],
            out_specs=pl.BlockSpec((TB, T), lambda bi, ti: (bi, 0)),
            scratch_shapes=[pltpu.VMEM((TB, T), jnp.float32)],
        ),
        compiler_params=pltpu.CompilerParams(
            dimension_semantics=("parallel", "arbitrary"),
            vmem_limit_bytes=48 * 1024 * 1024,
        ),
    )(hid_proj, enc, we_t, v2)

    return out[:B]


def attention_ref(hidden, encoder_outputs, W, b, v):
    """Pure-JAX reference mirroring the PyTorch module (mask=None path)."""
    B, T, H = encoder_outputs.shape
    hid_rep = jnp.repeat(hidden[:, None, :], T, axis=1)               # (B, T, H)
    cat = jnp.concatenate([hid_rep, encoder_outputs], axis=2)         # (B, T, 2H)
    energy = jnp.tanh(jnp.einsum("bto,ho->bth", cat, W) + b)          # (B, T, H)
    scores = jnp.einsum("bth,h->bt", energy, v)                       # (B, T)
    return jax.nn.softmax(scores, axis=1)


if __name__ == "__main__":
    B, T, H = 2, 8, 32
    key = jax.random.PRNGKey(0)
    k1, k2, k3, k4, k5 = jax.random.split(key, 5)

    hidden = jax.random.normal(k1, (B, H), dtype=jnp.float32)
    encoder_outputs = jax.random.normal(k2, (B, T, H), dtype=jnp.float32)

    # Deterministic parameter init (same shapes as the PyTorch module):
    # nn.Linear(2H, H): weight (H, 2H), bias (H,);  v: (H,)
    bound = 1.0 / jnp.sqrt(2.0 * H)
    W = jax.random.uniform(k3, (H, 2 * H), minval=-bound, maxval=bound,
                           dtype=jnp.float32)
    b = jax.random.uniform(k4, (H,), minval=-bound, maxval=bound,
                           dtype=jnp.float32)
    v = jax.random.uniform(k5, (H,), minval=0.0, maxval=1.0, dtype=jnp.float32)

    ref = attention_ref(hidden, encoder_outputs, W, b, v)

    # Full-precision path: must match the reference tightly.
    out_f32 = attention_pallas(hidden, encoder_outputs, W, b, v,
                               compute_dtype=jnp.float32)
    out_f32 = jax.block_until_ready(out_f32)
    assert out_f32.shape == (B, T)
    assert jnp.allclose(out_f32, ref, atol=1e-5, rtol=1e-5), (out_f32, ref)
    assert jnp.allclose(jnp.sum(out_f32, axis=1), 1.0, atol=1e-5)

    # Default (bf16 encoder matmul, f32 accumulate) path: same up to bf16 precision.
    out_bf16 = attention_pallas(hidden, encoder_outputs, W, b, v)
    out_bf16 = jax.block_until_ready(out_bf16)
    assert out_bf16.shape == (B, T)
    assert jnp.allclose(out_bf16, ref, atol=2e-2, rtol=2e-2), (out_bf16, ref)
    assert jnp.allclose(jnp.sum(out_bf16, axis=1), 1.0, atol=1e-3)

    print("KERNEL_OK")
</pallas_src>

<mosaic_0001>
module attributes {stable_mosaic.version = 11 : i64} {
  func.func @attention_kernel(%arg0: i32, %arg1: i32, %arg2: memref<2x32xf32, #tpu.memory_space<vmem>>, %arg3: memref<2x8x32xf32, #tpu.memory_space<vmem>>, %arg4: memref<32x32xf32, #tpu.memory_space<vmem>>, %arg5: memref<1x32xf32, #tpu.memory_space<vmem>>, %arg6: memref<2x8xf32, #tpu.memory_space<vmem>>, %arg7: memref<2x8xf32, #tpu.memory_space<vmem>>) attributes {dimension_semantics = [#tpu.dimension_semantics<parallel>, #tpu.dimension_semantics<arbitrary>], iteration_bounds = array<i64: 1, 1>, scalar_prefetch = 0 : i64, scratch_operands = 1 : i64, tpu.core_type = #tpu.core_type<tc>, window_params = [{transform_indices = @transform_0, window_bounds = array<i64: 2, 32>}, {transform_indices = @transform_1, window_bounds = array<i64: 2, 8, 32>}, {pipeline_mode = #tpu.pipeline_mode<synchronous>, transform_indices = @transform_2, window_bounds = array<i64: 32, 32>}, {pipeline_mode = #tpu.pipeline_mode<synchronous>, transform_indices = @transform_3, window_bounds = array<i64: 1, 32>}, {transform_indices = @transform_4, window_bounds = array<i64: 2, 8>}]} {
    %c0 = arith.constant 0 : index
    %c0_0 = arith.constant 0 : index
    %c0_1 = arith.constant 0 : index
    %0 = vector.load %arg3[%c0, %c0_0, %c0_1] : memref<2x8x32xf32, #tpu.memory_space<vmem>>, vector<2x8x32xf32>
    %1 = vector.shape_cast %0 : vector<2x8x32xf32> to vector<16x32xf32>
    %c0_2 = arith.constant 0 : index
    %c0_3 = arith.constant 0 : index
    %2 = vector.load %arg4[%c0_2, %c0_3] : memref<32x32xf32, #tpu.memory_space<vmem>>, vector<32x32xf32>
    %cst = arith.constant dense<0.000000e+00> : vector<16x32xf32>
    %3 = tpu.matmul %1, %2, %cst {dimension_numbers = #tpu.dot_dimension_numbers<[1], [0], [0], [1], [0, 0, 1, 1], [], []>} : vector<16x32xf32>, vector<32x32xf32>, vector<16x32xf32> -> vector<16x32xf32>
    %4 = vector.shape_cast %3 : vector<16x32xf32> to vector<2x8x32xf32>
    %c0_4 = arith.constant 0 : index
    %c0_5 = arith.constant 0 : index
    %5 = vector.load %arg2[%c0_4, %c0_5] : memref<2x32xf32, #tpu.memory_space<vmem>>, vector<2x32xf32>
    %6 = vector.shape_cast %5 : vector<2x32xf32> to vector<2x1x32xf32>
    %7 = vector.broadcast %6 : vector<2x1x32xf32> to vector<2x8x32xf32>
    %8 = arith.addf %4, %7 : vector<2x8x32xf32>
    %9 = math.tanh %8 : vector<2x8x32xf32>
    %c0_6 = arith.constant 0 : index
    %c0_7 = arith.constant 0 : index
    %10 = vector.load %arg5[%c0_6, %c0_7] : memref<1x32xf32, #tpu.memory_space<vmem>>, vector<1x32xf32>
    %11 = vector.shape_cast %10 : vector<1x32xf32> to vector<1x1x32xf32>
    %12 = vector.broadcast %11 : vector<1x1x32xf32> to vector<2x8x32xf32>
    %13 = arith.mulf %9, %12 : vector<2x8x32xf32>
    %cst_8 = arith.constant dense<0.000000e+00> : vector<2x8xf32>
    %14 = vector.multi_reduction <add>, %13, %cst_8 [2] : vector<2x8x32xf32> to vector<2x8xf32>
    %cst_9 = arith.constant dense<0xFF800000> : vector<2xf32>
    %15 = vector.multi_reduction <maximumf>, %14, %cst_9 [1] : vector<2x8xf32> to vector<2xf32>
    %16 = vector.shape_cast %15 : vector<2xf32> to vector<2x1xf32>
    %17 = vector.broadcast %16 : vector<2x1xf32> to vector<2x8xf32>
    %18 = arith.subf %14, %17 : vector<2x8xf32>
    %19 = math.exp %18 : vector<2x8xf32>
    %cst_10 = arith.constant dense<0.000000e+00> : vector<2xf32>
    %20 = vector.multi_reduction <add>, %19, %cst_10 [1] : vector<2x8xf32> to vector<2xf32>
    %21 = vector.shape_cast %20 : vector<2xf32> to vector<2x1xf32>
    %22 = vector.broadcast %21 : vector<2x1xf32> to vector<2x8xf32>
    %23 = arith.divf %19, %22 : vector<2x8xf32>
    %c0_11 = arith.constant 0 : index
    %c0_12 = arith.constant 0 : index
    %24 = vector.load %arg6[%c0_11, %c0_12] : memref<2x8xf32, #tpu.memory_space<vmem>>, vector<2x8xf32>
    tpu.vector_store %arg6[%c0_11, %c0_12], %23 {strides = array<i32>} : memref<2x8xf32, #tpu.memory_space<vmem>>, vector<2x8xf32>,
    return
  }
  func.func @transform_0(%arg0: i32, %arg1: i32) -> (i32, i32) {
    %c0_i32 = arith.constant 0 : i32
    %c0_i32_0 = arith.constant 0 : i32
    return %arg0, %c0_i32 : i32, i32
  }
  func.func @transform_1(%arg0: i32, %arg1: i32) -> (i32, i32, i32) {
    %c0_i32 = arith.constant 0 : i32
    %c0_i32_0 = arith.constant 0 : i32
    return %arg0, %arg1, %c0_i32 : i32, i32, i32
  }
  func.func @transform_2(%arg0: i32, %arg1: i32) -> (i32, i32) {
    %c0_i32 = arith.constant 0 : i32
    %c0_i32_0 = arith.constant 0 : i32
    %c0_i32_1 = arith.constant 0 : i32
    return %c0_i32, %c0_i32_0 : i32, i32
  }
  func.func @transform_3(%arg0: i32, %arg1: i32) -> (i32, i32) {
    %c0_i32 = arith.constant 0 : i32
    %c0_i32_0 = arith.constant 0 : i32
    %c0_i32_1 = arith.constant 0 : i32
    return %c0_i32, %c0_i32_0 : i32, i32
  }
  func.func @transform_4(%arg0: i32, %arg1: i32) -> (i32, i32) {
    %c0_i32 = arith.constant 0 : i32
    %c0_i32_0 = arith.constant 0 : i32
    return %arg0, %c0_i32 : i32, i32
  }
}

</mosaic_0001>

<llo_original>
// kernel: tpu_custom_call.1
$region0: #{tpu_custom_call.1}
  #allocation0 [shape = 'u32[]', space=smem, size = 0x4, offset = 0x4, fixed_abs, tag = 'smem constant byte address 0x4 - core index']
  #allocation1 [shape = 'u32[144,128]{1,0:T(1,128)}', space=vmem, size = 0x12000, scoped, tag = 'internal scratch']
  #allocation2 [shape = 'f32[2,8]{1,0:T(2,128)}', space=vmem, size = 0x400, scoped, tag = 'scratch operand']
  %s0 = inlined_call_operand.hbm [shape: f32[2,32], index: 0, kind: input, shape index: {}]
  %s1 = inlined_call_operand.hbm [shape: f32[2,8,32], index: 1, kind: input, shape index: {}]
  %s2 = inlined_call_operand.hbm [shape: f32[32,32], index: 2, kind: input, shape index: {}]
  %s3 = inlined_call_operand.vmem [shape: f32[1,32], index: 3, kind: input, shape index: {}]
  %s4 = inlined_call_operand.hbm [shape: f32[2,8], index: 4, kind: output, shape index: {}]
  %s5 = sld [smem:[#allocation0]]
  $region38: #{tpu_custom_call.1} parent=0
    _
  %s7 = ssub.s32 1, %s5
  %s8 = scalar_select 0, %s7, %s5
  $region1: #{tpu_custom_call.1} parent=0
    #allocation3 [shape = 'u8[1024]{0}', space=vmem, size = 0x400, scoped, tag = 'input window, operand 0, single buffered']
    #allocation4 [shape = 's32[1]{0}', space=sflag, size = 0x4, scoped, tag = 'scoped memory for tpu_custom_call.1']
    #allocation5 [shape = 's32[1]{0}', space=sflag, size = 0x4, scoped, tag = 'scoped memory for tpu_custom_call.1']
    #allocation6 [shape = 'u8[8192]{0}', space=vmem, size = 0x2000, scoped, tag = 'input window, operand 1, single buffered']
    #allocation7 [shape = 's32[1]{0}', space=sflag, size = 0x4, scoped, tag = 'scoped memory for tpu_custom_call.1']
    #allocation8 [shape = 'u8[16384]{0}', space=vmem, size = 0x4000, scoped, tag = 'input window, operand 2, single buffered']
    #allocation9 [shape = 'u8[1024]{0}', space=vmem, size = 0x400, scoped, tag = 'output window, operand 0, single buffered']
    %9 = vsyncpa [#allocation4], 0
    %10 = vsyncpa [#allocation7], 0
    %11 = vsyncpa [#allocation5], 0
    // Predicated region
    $region2: #{tpu_custom_call.1} parent=1 // pred_check
      _
    $region3: #{tpu_custom_call.1} parent=1 // pred_check_branch
      %13 = sbr.rel (0) target = $region5
    $region4: #{tpu_custom_call.1} parent=1 // pred_region
      %s15 = ssub.s32 32, 32
      %16 = vsyncadd [#allocation4], %s15
      %s18 = sshll.u32 [#allocation3], 4
      %s19 = int_to_ptr.vmem [resolvable:$true] %s18
      %21 = dma.hbm_to_vmem [thread:$0]  %s0, 32, %s19, [#allocation4]
    $region5: #{tpu_custom_call.1} parent=1 // pred_fallthru
      _
    // Predicated region
    $region6: #{tpu_custom_call.1} parent=1 // pred_check
      _
    $region7: #{tpu_custom_call.1} parent=1 // pred_check_branch
      %23 = sbr.rel (0) target = $region9
    $region8: #{tpu_custom_call.1} parent=1 // pred_region
      %s25 = ssub.s32 256, 256
      %26 = vsyncadd [#allocation7], %s25
      %s27 = sshll.u32 [#allocation6], 4
      %s28 = int_to_ptr.vmem [resolvable:$true] %s27
      %33 = dma.hbm_to_vmem [thread:$0]  %s1, 256, %s28, [#allocation7], 128, 128, 8
    $region9: #{tpu_custom_call.1} parent=1 // pred_fallthru
      _
    // Predicated region
    $region10: #{tpu_custom_call.1} parent=1 // pred_check
      _
    $region11: #{tpu_custom_call.1} parent=1 // pred_check_branch
      %35 = sbr.rel (0) target = $region13
    $region12: #{tpu_custom_call.1} parent=1 // pred_region
      %s37 = ssub.s32 512, 512
      %38 = vsyncadd [#allocation7], %s37
      %s39 = sshll.u32 [#allocation8], 4
      %s40 = int_to_ptr.vmem [resolvable:$true] %s39
      %45 = dma.hbm_to_vmem [thread:$0]  %s2, 512, %s40, [#allocation7], 128, 128, 8
    $region13: #{tpu_custom_call.1} parent=1 // pred_fallthru
      _
    // Predicated region
    $region14: #{tpu_custom_call.1} parent=1 // pred_check
      _
    $region15: #{tpu_custom_call.1} parent=1 // pred_check_branch
      %47 = sbr.rel (0) target = $region17
    $region16: #{tpu_custom_call.1} parent=1 // pred_region
      _
    $region17: #{tpu_custom_call.1} parent=1 // pred_fallthru
      _
    // Predicated region
    $region18: #{tpu_custom_call.1} parent=1 // pred_check
      _
    $region19: #{tpu_custom_call.1} parent=1 // pred_check_branch
      %49 = sbr.rel (0) target = $region21
    $region20: #{tpu_custom_call.1} parent=1 // pred_region
      %50 = dma.done [#allocation4], 32
    $region21: #{tpu_custom_call.1} parent=1 // pred_fallthru
      _
    // Predicated region
    $region22: #{tpu_custom_call.1} parent=1 // pred_check
      _
    $region23: #{tpu_custom_call.1} parent=1 // pred_check_branch
      %52 = sbr.rel (0) target = $region25
    $region24: #{tpu_custom_call.1} parent=1 // pred_region
      %53 = dma.done [#allocation7], 256
    $region25: #{tpu_custom_call.1} parent=1 // pred_fallthru
      _
    // Predicated region
    $region26: #{tpu_custom_call.1} parent=1 // pred_check
      _
    $region27: #{tpu_custom_call.1} parent=1 // pred_check_branch
      %55 = sbr.rel (0) target = $region29
    $region28: #{tpu_custom_call.1} parent=1 // pred_region
      %56 = dma.done [#allocation7], 512
    $region29: #{tpu_custom_call.1} parent=1 // pred_fallthru
      _
    %v57 = vld [vmem:[#allocation6] sm:$0xff]
    %v58 = vld [vmem:[#allocation6 + $0x8] sm:$0xff]
    %v59 = vld [vmem:[#allocation8] sm:$0xff]
    %v60 = vld [vmem:[#allocation8 + $0x8] sm:$0xff]
    %v61 = vld [vmem:[#allocation8 + $0x10] sm:$0xff]
    %v62 = vld [vmem:[#allocation8 + $0x18] sm:$0xff]
    %vm63 = vcmask 261120
    %v65 = vsel %vm63, %v57, 0
    %v68 = vsel %vm63, %v58, 0
    %70 = vmatprep.subr.mxu0 0.0
    %71 = vmatpush1.msra.mxu0 0.0
    %72 = vmatprep.subr.mxu0 0.0
    %73 = vmatpush1.msra.mxu0 0.0
    %74 = vmatprep.subr.mxu0 0.0
    %75 = vmatpush1.msra.mxu0 0.0
    %76 = vmatprep.subr.mxu0 0.0
    %77 = vmatpush1.msra.mxu0 0.0
    %78 = vmatprep.subr.mxu0 0.0
    %79 = vmatpush1.msra.mxu0 0.0
    %80 = vmatprep.subr.mxu0 0.0
    %81 = vmatpush1.msra.mxu0 0.0
    %82 = vmatprep.subr.mxu0 0.0
    %83 = vmatpush1.msra.mxu0 0.0
    %84 = vmatprep.subr.mxu0 0.0
    %85 = vmatpush1.msra.mxu0 0.0
    %86 = vmatprep.subr.mxu0 0.0
    %87 = vmatpush1.msra.mxu0 0.0
    %88 = vmatprep.subr.mxu0 0.0
    %89 = vmatpush1.msra.mxu0 0.0
    %90 = vmatprep.subr.mxu0 0.0
    %91 = vmatpush1.msra.mxu0 0.0
    %92 = vmatprep.subr.mxu0 0.0
    %93 = vmatpush1.msra.mxu0 0.0
    %94 = vmatprep.subr.mxu0 0.0
    %95 = vmatpush1.msra.mxu0 %v62
    %96 = vmatprep.subr.mxu0 0.0
    %97 = vmatpush1.msra.mxu0 %v61
    %98 = vmatprep.subr.mxu0 0.0
    %99 = vmatpush1.msra.mxu0 %v60
    %100 = vmatprep.subr.mxu0 0.0
    %101 = vmatpush1.msra.mxu0 %v59
    %102 = vmatprep.subr.mxu0 0.0
    %103 = vmatpush2.msra.mxu0 0.0
    %104 = vmatprep.subr.mxu0 0.0
    %105 = vmatpush2.msra.mxu0 0.0
    %106 = vmatprep.subr.mxu0 0.0
    %107 = vmatpush2.msra.mxu0 0.0
    %108 = vmatprep.subr.mxu0 0.0
    %109 = vmatpush2.msra.mxu0 0.0
    %110 = vmatprep.subr.mxu0 0.0
    %111 = vmatpush2.msra.mxu0 0.0
    %112 = vmatprep.subr.mxu0 0.0
    %113 = vmatpush2.msra.mxu0 0.0
    %114 = vmatprep.subr.mxu0 0.0
    %115 = vmatpush2.msra.mxu0 0.0
    %116 = vmatprep.subr.mxu0 0.0
    %117 = vmatpush2.msra.mxu0 0.0
    %118 = vmatprep.subr.mxu0 0.0
    %119 = vmatpush2.msra.mxu0 0.0
    %120 = vmatprep.subr.mxu0 0.0
    %121 = vmatpush2.msra.mxu0 0.0
    %122 = vmatprep.subr.mxu0 0.0
    %123 = vmatpush2.msra.mxu0 0.0
    %124 = vmatprep.subr.mxu0 0.0
    %125 = vmatpush2.msra.mxu0 0.0
    %126 = vmatprep.subr.mxu0 0.0
    %127 = vmatpush2.msra.mxu0 0.0
    %128 = vmatprep.subr.mxu0 0.0
    %129 = vmatpush2.msra.mxu0 0.0
    %130 = vmatprep.subr.mxu0 0.0
    %131 = vmatpush2.msra.mxu0 0.0
    %132 = vmatprep.subr.mxu0 0.0
    %133 = vmatpush2.msra.mxu0 0.0
    %134 = vmatprep.mubr.f32.mxu0 0.0
    %135 = vmatmul.mubr.f32.gmra.mxu0 %v65
    %v136 = vpop.f32.mrf.mxu0
    %v137 = vadd.f32 0.0, %v136
    %v138 = vpop.f32.mrf.mxu0
    %139 = vmatprep.mubr.f32.mxu0 0.0
    %140 = vmatmul.mubr.f32.gmra.mxu0 %v68
    %v141 = vpop.f32.mrf.mxu0
    %v142 = vadd.f32 0.0, %v141
    %v143 = vpop.f32.mrf.mxu0
    %144 = vdwg.mxu0
    %v145 = vld [vmem:[#allocation3] sm:$0x3]
    %v148 = vunpack.c.l.s4 1966171168
    %v149 = vunpack.c.0.s8 %v148
    %v150 = vlaneseq
    %v151 = vshrl.u32 %v150, 7
    %v152 = vsub.s32 %v149, %v151
    %v153 = vrot.slane %v145, %v152
    %v154 = vcombine.high %v153, %v153
    %v156 = vunpack.c.l.s4 1966171168
    %v157 = vunpack.c.0.s8 %v156
    %v158 = vlaneseq
    %v159 = vshrl.u32 %v158, 7
    %v160 = vsub.s32 %v157, %v159
    %v161 = vrot.slane %v153, %v160
    %v163 = vunpack.c.l.s4 1966171168
    %v164 = vunpack.c.0.s8 %v163
    %v165 = vlaneseq
    %v166 = vshrl.u32 %v165, 7
    %v167 = vsub.s32 %v164, %v166
    %v168 = vrot.slane %v154, %v167
    %v169 = vlaneseq
    %v170 = vshrl.u32 %v169, 7
    %v171 = vsub.s32 0, %v170
    %v172 = vrot.slane %v161, %v171
    %v173 = vlaneseq
    %v174 = vshrl.u32 %v173, 7
    %v175 = vsub.s32 0, %v174
    %v176 = vrot.slane %v168, %v175
    %v179 = vadd.f32 %v137, %v172
    %v180 = vadd.f32 %v142, %v176
    %v181 = vtanh.pop %v179
    %v182 = vtanh.pop %v180
    %v183 = vld [vmem:[%s3] sm:$0x1]
    %v185 = vlaneseq
    %v186 = vshrl.u32 %v185, 7
    %v187 = vsub.s32 0, %v186
    %v188 = vrot.slane %v183, %v187
    %v190 = vmul.f32 %v181, %v188
    %v191 = vmul.f32 %v182, %v188
    %v192 = vsel %vm63, %v190, 0.0
    %193 = vadd.xlane.f32.xlu0 %v192
    %v194 = vpop.xlane.xlu0 %193
    %v195 = vsel %vm63, %v191, 0.0
    %196 = vadd.xlane.f32.xlu0 %v195
    %v197 = vpop.xlane.xlu0 %196
    %v200 = vlaneseq
    %v201 = vand.u32 %v200, 127
    %v202 = vlaneseq
    %v203 = vshrl.u32 %v202, 7
    %v204 = vsub.s32 %v201, %v203
    %v205 = vrot.slane %v194, %v204
    %v206 = vlaneseq
    %v207 = vshrl.u32 %v206, 7
    %v208 = vsub.s32 %v201, %v207
    %v209 = vrot.slane %v197, %v208
    %vm210 = vcmask 1041409
    %v211 = vsel %vm210, %v209, %v205
    %vm213 = vcmask 58368
    %v214 = vsel %vm213, %v211, -inf
    %215 = vmax.xlane.f32.xlu0 %v214
    %v216 = vpop.xlane.xlu0 %215
    %v218 = vlaneseq
    %v219 = vshrl.u32 %v218, 7
    %v220 = vsub.s32 0, %v219
    %v221 = vrot.slane %v216, %v220
    %v222 = vlaneseq
    %v223 = vshrl.u32 %v222, 7
    %v224 = vsub.s32 1, %v223
    %v225 = vrot.slane %v216, %v224
    %v228 = vsub.f32 %v194, %v221
    %v229 = vsub.f32 %v197, %v225
    %v230 = vmul.f32 %v228, 1.442695
    %v231 = vpow.pop %v230
    %v232 = vmul.f32 %v229, 1.442695
    %v233 = vpow.pop %v232
    %236 = vset.pattern.permute.xlu0 0
    %237 = vperm.xlu0 %236, %v231
    %v238 = vpop.permute.xlu0 %237
    %239 = vset.pattern.permute.xlu0 0
    %240 = vperm.xlu0 %239, %v233
    %v241 = vpop.permute.xlu0 %240
    %v242 = vlaneseq
    %v243 = vshrl.u32 %v242, 7
    %v244 = vsub.s32 %v201, %v243
    %v245 = vrot.slane %v238, %v244
    %v246 = vlaneseq
    %v247 = vshrl.u32 %v246, 7
    %v248 = vsub.s32 %v201, %v247
    %v249 = vrot.slane %v241, %v248
    %v250 = vsel %vm210, %v249, %v245
    %v252 = vsel %vm213, %v250, 0.0
    %253 = vadd.xlane.f32.xlu0 %v252
    %v254 = vpop.xlane.xlu0 %253
    %v256 = vlaneseq
    %v257 = vshrl.u32 %v256, 7
    %v258 = vsub.s32 0, %v257
    %v259 = vrot.slane %v254, %v258
    %v260 = vlaneseq
    %v261 = vshrl.u32 %v260, 7
    %v262 = vsub.s32 1, %v261
    %v263 = vrot.slane %v254, %v262
    %v266 = vrcp.pop %v259
    %v267 = vmul.f32 %v231, %v266
    %v268 = vrcp.pop %v263
    %v269 = vmul.f32 %v233, %v268
    %272 = vset.pattern.permute.xlu0 0
    %273 = vperm.xlu0 %272, %v267
    %v274 = vpop.permute.xlu0 %273
    %275 = vset.pattern.permute.xlu0 0
    %276 = vperm.xlu0 %275, %v269
    %v277 = vpop.permute.xlu0 %276
    %v278 = vlaneseq
    %v279 = vshrl.u32 %v278, 7
    %v280 = vsub.s32 %v201, %v279
    %v281 = vrot.slane %v274, %v280
    %v282 = vlaneseq
    %v283 = vshrl.u32 %v282, 7
    %v284 = vsub.s32 %v201, %v283
    %v285 = vrot.slane %v277, %v284
    %v286 = vsel %vm210, %v285, %v281
    %288 = vst.msk [vmem:[#allocation9] sm:$0x3] %vm213, %v286
    // Predicated region
    $region30: #{tpu_custom_call.1} parent=1 // pred_check
      _
    $region31: #{tpu_custom_call.1} parent=1 // pred_check_branch
      %290 = sbr.rel (0) target = $region33
    $region32: #{tpu_custom_call.1} parent=1 // pred_region
      %s292 = ssub.s32 32, 32
      %293 = vsyncadd [#allocation5], %s292
      %s295 = sshll.u32 [#allocation9], 4
      %s296 = int_to_ptr.vmem [resolvable:$true] %s295
      %298 = dma.vmem_to_hbm [thread:$0]  %s296, 32, %s4, [#allocation5]
    $region33: #{tpu_custom_call.1} parent=1 // pred_fallthru
      _
    // Predicated region
    $region34: #{tpu_custom_call.1} parent=1 // pred_check
      _
    $region35: #{tpu_custom_call.1} parent=1 // pred_check_branch
      %300 = sbr.rel (0) target = $region37
    $region36: #{tpu_custom_call.1} parent=1 // pred_region
      %301 = dma.done [#allocation5], 32
    $region37: #{tpu_custom_call.1} parent=1 // pred_fallthru
      _
    %302 = vsyncpa [#allocation4], 1
    %303 = vsyncpa [#allocation7], 1
    %304 = vsyncpa [#allocation5], 1

</llo_original>
